<compile_context>
chip_gen: v7x
topology: tpu7x:2x2x1
jax: 0.10.0
libtpu: 0.0.40
codegen_flags: <defaults>
</compile_context>

<pallas_src>
import jax
import jax.numpy as jnp
from jax.experimental import pallas as pl
from jax.experimental.pallas import tpu as pltpu

_LANE = 128
_SUBLANE = 8
_NEG_BIG = -1e30  # bias for padded softmax lanes (exp underflows to exactly 0 in f32)


def _round_up(x, m):
    return (x + m - 1) // m * m


def _choose_batch_tile(B, batch_tile):
    """Batch tile: multiple of 8; for B > 256 keep >= 2 grid steps so the
    ("parallel",) batch axis can shard across v7x's two TensorCores."""
    if B > 2 * _LANE:
        tb = _round_up(pl.cdiv(B, 2), _SUBLANE)
    else:
        tb = _round_up(B, _SUBLANE)
    return max(_SUBLANE, min(_round_up(batch_tile, _SUBLANE), tb))


def meta_actor_kernel(obs_ref,
                      w1_ref, b1_ref,
                      w2_ref, b2_ref,
                      w3_ref, b3_ref,
                      w4_ref, b4_ref,
                      probs_ref, feat_ref):
    # FC1 + ReLU (bf16 x bf16 MXU matmul, f32 accumulate). obs is already bf16.
    x = obs_ref[...]
    h = jnp.dot(x, w1_ref[...], preferred_element_type=jnp.float32) + b1_ref[...]
    h = jnp.maximum(h, 0.0)
    # FC2 + ReLU
    h = jnp.dot(h.astype(jnp.bfloat16), w2_ref[...],
                preferred_element_type=jnp.float32) + b2_ref[...]
    h = jnp.maximum(h, 0.0)
    # FC3 + ReLU -> second output (`result` in the PyTorch module)
    h = jnp.dot(h.astype(jnp.bfloat16), w3_ref[...],
                preferred_element_type=jnp.float32) + b3_ref[...]
    h = jnp.maximum(h, 0.0)
    feat_ref[...] = h.astype(feat_ref.dtype)
    # FC4 (lane-dense, padded columns: zero weight, -1e30 bias) + softmax (f32 logits).
    logits = jnp.dot(h.astype(jnp.bfloat16), w4_ref[...],
                     preferred_element_type=jnp.float32) + b4_ref[...]
    m = jnp.max(logits, axis=-1, keepdims=True)
    e = jnp.exp(logits - m)                       # padded lanes -> exp(-huge) == 0
    denom = jnp.sum(e, axis=-1, keepdims=True)
    probs_ref[...] = (e * pl.reciprocal(denom, approx=True)).astype(probs_ref.dtype)


def meta_actor_forward(obs, params, n_option, *, batch_tile=512,
                       out_dtype=jnp.bfloat16):
    """obs: (B, obs_dim). params: bf16 weights (in,out) / f32 biases (1,out) with FC4
    pre-padded to a lane-dense width. Returns (probs (B, n_option), feat (B, 128))."""
    B, obs_dim = obs.shape
    if obs.dtype != jnp.bfloat16:
        obs = obs.astype(jnp.bfloat16)   # halves per-step input DMA; f32 acc kept

    w1, b1 = params["w1"], params["b1"]
    w2, b2 = params["w2"], params["b2"]
    w3, b3 = params["w3"], params["b3"]
    w4, b4 = params["w4"], params["b4"]
    act_pad = w4.shape[1]

    tb = _choose_batch_tile(B, batch_tile)
    grid_b = pl.cdiv(B, tb)   # ragged final block handled by Pallas (no jnp.pad)

    def batch_spec(cols):
        return pl.BlockSpec((tb, cols), lambda i: (i, 0))

    def resident_spec(a):
        # Full-array block, constant index_map -> DMA'd once, VMEM-resident across
        # all grid steps (no per-step weight re-DMA).
        return pl.BlockSpec(a.shape, lambda i: (0, 0))

    weights = (w1, b1, w2, b2, w3, b3, w4, b4)
    out_itemsize = jnp.finfo(out_dtype).bits // 8
    flops = 2 * B * (obs_dim * 512 + 512 * 256 + 256 * 128 + 128 * act_pad)
    bytes_accessed = (int(obs.size) * obs.dtype.itemsize
                      + sum(int(a.size) * a.dtype.itemsize for a in weights)
                      + B * (act_pad + 128) * out_itemsize)

    probs_p, feat = pl.pallas_call(
        meta_actor_kernel,
        out_shape=(
            jax.ShapeDtypeStruct((B, act_pad), out_dtype),  # padded softmax probs
            jax.ShapeDtypeStruct((B, 128), out_dtype),      # relu(FC3) features
        ),
        grid=(grid_b,),
        in_specs=[batch_spec(obs_dim)] + [resident_spec(a) for a in weights],
        out_specs=(batch_spec(act_pad), batch_spec(128)),
        compiler_params=pltpu.CompilerParams(
            dimension_semantics=("parallel",)),
        cost_estimate=pl.CostEstimate(flops=flops,
                                      transcendentals=B * act_pad,
                                      bytes_accessed=bytes_accessed),
    )(obs, *weights)

    return probs_p[:, :n_option], feat


def init_params(key, obs_dim, n_option):
    """Deterministic synthetic init matching nn.Linear. Returns (kernel_params with
    bf16 weights, f32 master params for the reference). Weights stored (in, out)."""
    ks = jax.random.split(key, 8)

    def lin(kw, kb, fan_in, fan_out):
        bound = 1.0 / (float(fan_in) ** 0.5)
        w = jax.random.uniform(kw, (fan_in, fan_out), jnp.float32, -bound, bound)
        b = jax.random.uniform(kb, (1, fan_out), jnp.float32, -bound, bound)
        return w, b

    w1, b1 = lin(ks[0], ks[1], obs_dim, 512)
    w2, b2 = lin(ks[2], ks[3], 512, 256)
    w3, b3 = lin(ks[4], ks[5], 256, 128)
    w4, b4 = lin(ks[6], ks[7], 128, n_option)

    # Lane-dense padding of the final layer: zero weights / -1e30 bias in padded
    # columns so softmax over the padded width equals softmax over n_option columns.
    act_pad = _round_up(max(n_option, 1), _LANE)
    if act_pad != n_option:
        w4 = jnp.pad(w4, ((0, 0), (0, act_pad - n_option)))
        b4 = jnp.concatenate(
            [b4, jnp.full((1, act_pad - n_option), _NEG_BIG, jnp.float32)], axis=1)

    f32_params = dict(w1=w1, b1=b1, w2=w2, b2=b2, w3=w3, b3=b3, w4=w4, b4=b4)
    kern_params = {k: (v.astype(jnp.bfloat16) if k.startswith("w") else v)
                   for k, v in f32_params.items()}
    return kern_params, f32_params


def reference_forward_bf16(obs, params, n_option):
    """Plain-JAX reference with the kernel's bf16-operand / f32-accumulate numerics."""
    def mm(x, w):
        return jnp.dot(x.astype(jnp.bfloat16), w.astype(jnp.bfloat16),
                       preferred_element_type=jnp.float32)

    h = jnp.maximum(mm(obs, params["w1"]) + params["b1"], 0.0)
    h = jnp.maximum(mm(h, params["w2"]) + params["b2"], 0.0)
    h = jnp.maximum(mm(h, params["w3"]) + params["b3"], 0.0)
    logits = mm(h, params["w4"]) + params["b4"]
    probs = jax.nn.softmax(logits, axis=1)[:, :n_option]
    return probs, h


def reference_forward_f32(obs, params, n_option):
    """Full-f32 reference with the original PyTorch module's numerics."""
    h = jnp.maximum(obs @ params["w1"] + params["b1"], 0.0)
    h = jnp.maximum(h @ params["w2"] + params["b2"], 0.0)
    h = jnp.maximum(h @ params["w3"] + params["b3"], 0.0)
    logits = h @ params["w4"] + params["b4"]
    probs = jax.nn.softmax(logits, axis=1)[:, :n_option]
    return probs, h


if __name__ == "__main__":
    key = jax.random.PRNGKey(0)
    k_obs, k_par = jax.random.split(key)

    batch, obs_dim, n_option = 8, 32, 8   # small shapes consistent with the module
    obs = jax.random.normal(k_obs, (batch, obs_dim), jnp.float32)
    kern_params, f32_params = init_params(k_par, obs_dim, n_option)

    probs, feat = meta_actor_forward(obs, kern_params, n_option)
    probs = jax.block_until_ready(probs)
    feat = jax.block_until_ready(feat)

    assert probs.shape == (batch, n_option)
    assert feat.shape == (batch, 128)

    probs_f = probs.astype(jnp.float32)
    feat_f = feat.astype(jnp.float32)

    # Tight check: kernel vs reference using identical bf16-operand numerics.
    ref_probs, ref_feat = reference_forward_bf16(obs, kern_params, n_option)
    assert jnp.allclose(feat_f, ref_feat, atol=1.5e-2, rtol=1.5e-2)
    assert jnp.allclose(probs_f, ref_probs, atol=1e-2, rtol=1e-2)

    # Loose check: kernel vs the original module's f32 numerics (bf16 weight quant).
    ref_probs32, ref_feat32 = reference_forward_f32(obs, f32_params, n_option)
    assert jnp.allclose(feat_f, ref_feat32, atol=5e-2, rtol=5e-2)
    assert jnp.allclose(probs_f, ref_probs32, atol=3e-2, rtol=3e-2)

    # Rows sum to ~1 (approx reciprocal + bf16 store => ~1e-3 level).
    assert jnp.allclose(jnp.sum(probs_f, axis=1), 1.0, atol=1e-2)

    print("KERNEL_OK")
</pallas_src>

<mosaic_0001>
module attributes {stable_mosaic.version = 11 : i64} {
  func.func @meta_actor_kernel(%arg0: i32, %arg1: memref<8x32xbf16, #tpu.memory_space<vmem>>, %arg2: memref<32x512xbf16, #tpu.memory_space<vmem>>, %arg3: memref<1x512xf32, #tpu.memory_space<vmem>>, %arg4: memref<512x256xbf16, #tpu.memory_space<vmem>>, %arg5: memref<1x256xf32, #tpu.memory_space<vmem>>, %arg6: memref<256x128xbf16, #tpu.memory_space<vmem>>, %arg7: memref<1x128xf32, #tpu.memory_space<vmem>>, %arg8: memref<128x128xbf16, #tpu.memory_space<vmem>>, %arg9: memref<1x128xf32, #tpu.memory_space<vmem>>, %arg10: memref<8x128xbf16, #tpu.memory_space<vmem>>, %arg11: memref<8x128xbf16, #tpu.memory_space<vmem>>) attributes {dimension_semantics = [#tpu.dimension_semantics<parallel>], iteration_bounds = array<i64: 1>, scalar_prefetch = 0 : i64, scratch_operands = 0 : i64, tpu.core_type = #tpu.core_type<tc>, window_params = [{transform_indices = @transform_0, window_bounds = array<i64: 8, 32>}, {pipeline_mode = #tpu.pipeline_mode<synchronous>, transform_indices = @transform_1, window_bounds = array<i64: 32, 512>}, {pipeline_mode = #tpu.pipeline_mode<synchronous>, transform_indices = @transform_2, window_bounds = array<i64: 1, 512>}, {pipeline_mode = #tpu.pipeline_mode<synchronous>, transform_indices = @transform_3, window_bounds = array<i64: 512, 256>}, {pipeline_mode = #tpu.pipeline_mode<synchronous>, transform_indices = @transform_4, window_bounds = array<i64: 1, 256>}, {pipeline_mode = #tpu.pipeline_mode<synchronous>, transform_indices = @transform_5, window_bounds = array<i64: 256, 128>}, {pipeline_mode = #tpu.pipeline_mode<synchronous>, transform_indices = @transform_6, window_bounds = array<i64: 1, 128>}, {pipeline_mode = #tpu.pipeline_mode<synchronous>, transform_indices = @transform_7, window_bounds = array<i64: 128, 128>}, {pipeline_mode = #tpu.pipeline_mode<synchronous>, transform_indices = @transform_8, window_bounds = array<i64: 1, 128>}, {transform_indices = @transform_9, window_bounds = array<i64: 8, 128>}, {transform_indices = @transform_10, window_bounds = array<i64: 8, 128>}]} {
    %c0 = arith.constant 0 : index
    %c0_0 = arith.constant 0 : index
    %0 = vector.load %arg1[%c0, %c0_0] : memref<8x32xbf16, #tpu.memory_space<vmem>>, vector<8x32xbf16>
    %c0_1 = arith.constant 0 : index
    %c0_2 = arith.constant 0 : index
    %1 = vector.load %arg2[%c0_1, %c0_2] : memref<32x512xbf16, #tpu.memory_space<vmem>>, vector<32x512xbf16>
    %cst = arith.constant dense<0.000000e+00> : vector<8x512xf32>
    %2 = tpu.matmul %0, %1, %cst {dimension_numbers = #tpu.dot_dimension_numbers<[1], [0], [0], [1], [0, 0, 1, 1], [], []>} : vector<8x32xbf16>, vector<32x512xbf16>, vector<8x512xf32> -> vector<8x512xf32>
    %c0_3 = arith.constant 0 : index
    %c0_4 = arith.constant 0 : index
    %3 = vector.load %arg3[%c0_3, %c0_4] : memref<1x512xf32, #tpu.memory_space<vmem>>, vector<1x512xf32>
    %4 = vector.broadcast %3 : vector<1x512xf32> to vector<8x512xf32>
    %5 = arith.addf %2, %4 : vector<8x512xf32>
    %cst_5 = arith.constant 0.000000e+00 : f32
    %6 = vector.broadcast %cst_5 : f32 to vector<8x512xf32>
    %7 = arith.maximumf %5, %6 : vector<8x512xf32>
    %8 = arith.truncf %7 : vector<8x512xf32> to vector<8x512xbf16>
    %c0_6 = arith.constant 0 : index
    %c0_7 = arith.constant 0 : index
    %9 = vector.load %arg4[%c0_6, %c0_7] : memref<512x256xbf16, #tpu.memory_space<vmem>>, vector<512x256xbf16>
    %cst_8 = arith.constant dense<0.000000e+00> : vector<8x256xf32>
    %10 = tpu.matmul %8, %9, %cst_8 {dimension_numbers = #tpu.dot_dimension_numbers<[1], [0], [0], [1], [0, 0, 1, 1], [], []>} : vector<8x512xbf16>, vector<512x256xbf16>, vector<8x256xf32> -> vector<8x256xf32>
    %c0_9 = arith.constant 0 : index
    %c0_10 = arith.constant 0 : index
    %11 = vector.load %arg5[%c0_9, %c0_10] : memref<1x256xf32, #tpu.memory_space<vmem>>, vector<1x256xf32>
    %12 = vector.broadcast %11 : vector<1x256xf32> to vector<8x256xf32>
    %13 = arith.addf %10, %12 : vector<8x256xf32>
    %cst_11 = arith.constant 0.000000e+00 : f32
    %14 = vector.broadcast %cst_11 : f32 to vector<8x256xf32>
    %15 = arith.maximumf %13, %14 : vector<8x256xf32>
    %16 = arith.truncf %15 : vector<8x256xf32> to vector<8x256xbf16>
    %c0_12 = arith.constant 0 : index
    %c0_13 = arith.constant 0 : index
    %17 = vector.load %arg6[%c0_12, %c0_13] : memref<256x128xbf16, #tpu.memory_space<vmem>>, vector<256x128xbf16>
    %cst_14 = arith.constant dense<0.000000e+00> : vector<8x128xf32>
    %18 = tpu.matmul %16, %17, %cst_14 {dimension_numbers = #tpu.dot_dimension_numbers<[1], [0], [0], [1], [0, 0, 1, 1], [], []>} : vector<8x256xbf16>, vector<256x128xbf16>, vector<8x128xf32> -> vector<8x128xf32>
    %c0_15 = arith.constant 0 : index
    %c0_16 = arith.constant 0 : index
    %19 = vector.load %arg7[%c0_15, %c0_16] : memref<1x128xf32, #tpu.memory_space<vmem>>, vector<1x128xf32>
    %20 = vector.broadcast %19 : vector<1x128xf32> to vector<8x128xf32>
    %21 = arith.addf %18, %20 : vector<8x128xf32>
    %cst_17 = arith.constant 0.000000e+00 : f32
    %22 = vector.broadcast %cst_17 : f32 to vector<8x128xf32>
    %23 = arith.maximumf %21, %22 : vector<8x128xf32>
    %24 = arith.truncf %23 : vector<8x128xf32> to vector<8x128xbf16>
    %c0_18 = arith.constant 0 : index
    %c0_19 = arith.constant 0 : index
    %25 = vector.load %arg11[%c0_18, %c0_19] : memref<8x128xbf16, #tpu.memory_space<vmem>>, vector<8x128xbf16>
    tpu.vector_store %arg11[%c0_18, %c0_19], %24 {strides = array<i32>} : memref<8x128xbf16, #tpu.memory_space<vmem>>, vector<8x128xbf16>,
    %26 = arith.truncf %23 : vector<8x128xf32> to vector<8x128xbf16>
    %c0_20 = arith.constant 0 : index
    %c0_21 = arith.constant 0 : index
    %27 = vector.load %arg8[%c0_20, %c0_21] : memref<128x128xbf16, #tpu.memory_space<vmem>>, vector<128x128xbf16>
    %cst_22 = arith.constant dense<0.000000e+00> : vector<8x128xf32>
    %28 = tpu.matmul %26, %27, %cst_22 {dimension_numbers = #tpu.dot_dimension_numbers<[1], [0], [0], [1], [0, 0, 1, 1], [], []>} : vector<8x128xbf16>, vector<128x128xbf16>, vector<8x128xf32> -> vector<8x128xf32>
    %c0_23 = arith.constant 0 : index
    %c0_24 = arith.constant 0 : index
    %29 = vector.load %arg9[%c0_23, %c0_24] : memref<1x128xf32, #tpu.memory_space<vmem>>, vector<1x128xf32>
    %30 = vector.broadcast %29 : vector<1x128xf32> to vector<8x128xf32>
    %31 = arith.addf %28, %30 : vector<8x128xf32>
    %cst_25 = arith.constant dense<0xFF800000> : vector<8xf32>
    %32 = vector.multi_reduction <maximumf>, %31, %cst_25 [1] : vector<8x128xf32> to vector<8xf32>
    %33 = vector.shape_cast %32 : vector<8xf32> to vector<8x1xf32>
    %34 = vector.broadcast %33 : vector<8x1xf32> to vector<8x128xf32>
    %35 = arith.subf %31, %34 : vector<8x128xf32>
    %36 = math.exp %35 : vector<8x128xf32>
    %cst_26 = arith.constant dense<0.000000e+00> : vector<8xf32>
    %37 = vector.multi_reduction <add>, %36, %cst_26 [1] : vector<8x128xf32> to vector<8xf32>
    %38 = vector.shape_cast %37 : vector<8xf32> to vector<8x1xf32>
    %39 = tpu.reciprocal %38 {approx = true} : vector<8x1xf32> -> vector<8x1xf32>
    %40 = vector.broadcast %39 : vector<8x1xf32> to vector<8x128xf32>
    %41 = arith.mulf %36, %40 : vector<8x128xf32>
    %42 = arith.truncf %41 : vector<8x128xf32> to vector<8x128xbf16>
    %c0_27 = arith.constant 0 : index
    %c0_28 = arith.constant 0 : index
    %43 = vector.load %arg10[%c0_27, %c0_28] : memref<8x128xbf16, #tpu.memory_space<vmem>>, vector<8x128xbf16>
    tpu.vector_store %arg10[%c0_27, %c0_28], %42 {strides = array<i32>} : memref<8x128xbf16, #tpu.memory_space<vmem>>, vector<8x128xbf16>,
    return
  }
  func.func @transform_0(%arg0: i32) -> (i32, i32) {
    %c0_i32 = arith.constant 0 : i32
    %c0_i32_0 = arith.constant 0 : i32
    return %arg0, %c0_i32 : i32, i32
  }
  func.func @transform_1(%arg0: i32) -> (i32, i32) {
    %c0_i32 = arith.constant 0 : i32
    %c0_i32_0 = arith.constant 0 : i32
    %c0_i32_1 = arith.constant 0 : i32
    return %c0_i32, %c0_i32_0 : i32, i32
  }
  func.func @transform_2(%arg0: i32) -> (i32, i32) {
    %c0_i32 = arith.constant 0 : i32
    %c0_i32_0 = arith.constant 0 : i32
    %c0_i32_1 = arith.constant 0 : i32
    return %c0_i32, %c0_i32_0 : i32, i32
  }
  func.func @transform_3(%arg0: i32) -> (i32, i32) {
    %c0_i32 = arith.constant 0 : i32
    %c0_i32_0 = arith.constant 0 : i32
    %c0_i32_1 = arith.constant 0 : i32
    return %c0_i32, %c0_i32_0 : i32, i32
  }
  func.func @transform_4(%arg0: i32) -> (i32, i32) {
    %c0_i32 = arith.constant 0 : i32
    %c0_i32_0 = arith.constant 0 : i32
    %c0_i32_1 = arith.constant 0 : i32
    return %c0_i32, %c0_i32_0 : i32, i32
  }
  func.func @transform_5(%arg0: i32) -> (i32, i32) {
    %c0_i32 = arith.constant 0 : i32
    %c0_i32_0 = arith.constant 0 : i32
    %c0_i32_1 = arith.constant 0 : i32
    return %c0_i32, %c0_i32_0 : i32, i32
  }
  func.func @transform_6(%arg0: i32) -> (i32, i32) {
    %c0_i32 = arith.constant 0 : i32
    %c0_i32_0 = arith.constant 0 : i32
    %c0_i32_1 = arith.constant 0 : i32
    return %c0_i32, %c0_i32_0 : i32, i32
  }
  func.func @transform_7(%arg0: i32) -> (i32, i32) {
    %c0_i32 = arith.constant 0 : i32
    %c0_i32_0 = arith.constant 0 : i32
    %c0_i32_1 = arith.constant 0 : i32
    return %c0_i32, %c0_i32_0 : i32, i32
  }
  func.func @transform_8(%arg0: i32) -> (i32, i32) {
    %c0_i32 = arith.constant 0 : i32
    %c0_i32_0 = arith.constant 0 : i32
    %c0_i32_1 = arith.constant 0 : i32
    return %c0_i32, %c0_i32_0 : i32, i32
  }
  func.func @transform_9(%arg0: i32) -> (i32, i32) {
    %c0_i32 = arith.constant 0 : i32
    %c0_i32_0 = arith.constant 0 : i32
    return %arg0, %c0_i32 : i32, i32
  }
  func.func @transform_10(%arg0: i32) -> (i32, i32) {
    %c0_i32 = arith.constant 0 : i32
    %c0_i32_0 = arith.constant 0 : i32
    return %arg0, %c0_i32 : i32, i32
  }
}

</mosaic_0001>

<llo_original>
// kernel: tpu_custom_call.1
$region0: #{tpu_custom_call.1}
  #allocation0 [shape = 'u32[]', space=smem, size = 0x4, offset = 0x4, fixed_abs, tag = 'smem constant byte address 0x4 - core index']
  #allocation1 [shape = 'u32[144,128]{1,0:T(1,128)}', space=vmem, size = 0x12000, scoped, tag = 'internal scratch']
  %s0 = inlined_call_operand.hbm [shape: bf16[8,32], index: 0, kind: input, shape index: {}]
  %s1 = inlined_call_operand.hbm [shape: bf16[32,512], index: 1, kind: input, shape index: {}]
  %s2 = inlined_call_operand.vmem [shape: f32[1,512], index: 2, kind: input, shape index: {}]
  %s3 = inlined_call_operand.hbm [shape: bf16[512,256], index: 3, kind: input, shape index: {}]
  %s4 = inlined_call_operand.vmem [shape: f32[1,256], index: 4, kind: input, shape index: {}]
  %s5 = inlined_call_operand.hbm [shape: bf16[256,128], index: 5, kind: input, shape index: {}]
  %s6 = inlined_call_operand.vmem [shape: f32[1,128], index: 6, kind: input, shape index: {}]
  %s7 = inlined_call_operand.hbm [shape: bf16[128,128], index: 7, kind: input, shape index: {}]
  %s8 = inlined_call_operand.vmem [shape: f32[1,128], index: 8, kind: input, shape index: {}]
  %s9 = inlined_call_operand.hbm [shape: bf16[8,128], index: 9, kind: output, shape index: {0}]
  %s10 = inlined_call_operand.hbm [shape: bf16[8,128], index: 10, kind: output, shape index: {1}]
  %11 = xla_tuple %s9, %s10
  %s12 = sld [smem:[#allocation0]]
  $region74: #{tpu_custom_call.1} parent=0
    _
  %s14 = ssub.s32 1, %s12
  %s15 = scalar_select 0, %s14, %s12
  $region1: #{tpu_custom_call.1} parent=0
    #allocation2 [shape = 'u8[2048]{0}', space=vmem, size = 0x800, scoped, tag = 'input window, operand 0, single buffered']
    #allocation3 [shape = 's32[1]{0}', space=sflag, size = 0x4, scoped, tag = 'scoped memory for tpu_custom_call.1']
    #allocation4 [shape = 's32[1]{0}', space=sflag, size = 0x4, scoped, tag = 'scoped memory for tpu_custom_call.1']
    #allocation5 [shape = 'u8[32768]{0}', space=vmem, size = 0x8000, scoped, tag = 'input window, operand 1, single buffered']
    #allocation6 [shape = 's32[1]{0}', space=sflag, size = 0x4, scoped, tag = 'scoped memory for tpu_custom_call.1']
    #allocation7 [shape = 'u8[262144]{0}', space=vmem, size = 0x40000, scoped, tag = 'input window, operand 3, single buffered']
    #allocation8 [shape = 'u8[65536]{0}', space=vmem, size = 0x10000, scoped, tag = 'input window, operand 5, single buffered']
    #allocation9 [shape = 's32[1]{0}', space=sflag, size = 0x4, scoped, tag = 'scoped memory for tpu_custom_call.1']
    #allocation10 [shape = 'u8[32768]{0}', space=vmem, size = 0x8000, scoped, tag = 'input window, operand 7, single buffered']
    #allocation11 [shape = 'u8[2048]{0}', space=vmem, size = 0x800, scoped, tag = 'output window, operand 0, single buffered']
    #allocation12 [shape = 'u8[2048]{0}', space=vmem, size = 0x800, scoped, tag = 'output window, operand 1, single buffered']
    #allocation13 [shape = 's32[1]{0}', space=sflag, size = 0x4, scoped, tag = 'scoped memory for tpu_custom_call.1']
    %16 = vsyncpa [#allocation3], 0
    %17 = vsyncpa [#allocation6], 0
    %18 = vsyncpa [#allocation9], 0
    %19 = vsyncpa [#allocation4], 0
    %20 = vsyncpa [#allocation13], 0
    // Predicated region
    $region2: #{tpu_custom_call.1} parent=1 // pred_check
      _
    $region3: #{tpu_custom_call.1} parent=1 // pred_check_branch
      %22 = sbr.rel (0) target = $region5
    $region4: #{tpu_custom_call.1} parent=1 // pred_region
      %s24 = ssub.s32 64, 64
      %25 = vsyncadd [#allocation3], %s24
      %s27 = sshll.u32 [#allocation2], 4
      %s28 = int_to_ptr.vmem [resolvable:$true] %s27
      %30 = dma.hbm_to_vmem [thread:$0]  %s0, 64, %s28, [#allocation3]
    $region5: #{tpu_custom_call.1} parent=1 // pred_fallthru
      _
    // Predicated region
    $region6: #{tpu_custom_call.1} parent=1 // pred_check
      _
    $region7: #{tpu_custom_call.1} parent=1 // pred_check_branch
      %32 = sbr.rel (0) target = $region9
    $region8: #{tpu_custom_call.1} parent=1 // pred_region
      %s34 = ssub.s32 1024, 1024
      %35 = vsyncadd [#allocation6], %s34
      %s36 = sshll.u32 [#allocation5], 4
      %s37 = int_to_ptr.vmem [resolvable:$true] %s36
      %42 = dma.hbm_to_vmem [thread:$0]  %s1, 1024, %s37, [#allocation6], 256, 256, 16
    $region9: #{tpu_custom_call.1} parent=1 // pred_fallthru
      _
    // Predicated region
    $region10: #{tpu_custom_call.1} parent=1 // pred_check
      _
    $region11: #{tpu_custom_call.1} parent=1 // pred_check_branch
      %44 = sbr.rel (0) target = $region13
    $region12: #{tpu_custom_call.1} parent=1 // pred_region
      _
    $region13: #{tpu_custom_call.1} parent=1 // pred_fallthru
      _
    // Predicated region
    $region14: #{tpu_custom_call.1} parent=1 // pred_check
      _
    $region15: #{tpu_custom_call.1} parent=1 // pred_check_branch
      %46 = sbr.rel (0) target = $region17
    $region16: #{tpu_custom_call.1} parent=1 // pred_region
      %s48 = ssub.s32 8192, 8192
      %49 = vsyncadd [#allocation6], %s48
      %s50 = sshll.u32 [#allocation7], 4
      %s51 = int_to_ptr.vmem [resolvable:$true] %s50
      %56 = dma.hbm_to_vmem [thread:$0]  %s3, 8192, %s51, [#allocation6], 128, 128, 8
    $region17: #{tpu_custom_call.1} parent=1 // pred_fallthru
      _
    // Predicated region
    $region18: #{tpu_custom_call.1} parent=1 // pred_check
      _
    $region19: #{tpu_custom_call.1} parent=1 // pred_check_branch
      %58 = sbr.rel (0) target = $region21
    $region20: #{tpu_custom_call.1} parent=1 // pred_region
      _
    $region21: #{tpu_custom_call.1} parent=1 // pred_fallthru
      _
    // Predicated region
    $region22: #{tpu_custom_call.1} parent=1 // pred_check
      _
    $region23: #{tpu_custom_call.1} parent=1 // pred_check_branch
      %60 = sbr.rel (0) target = $region25
    $region24: #{tpu_custom_call.1} parent=1 // pred_region
      %s62 = ssub.s32 2048, 2048
      %63 = vsyncadd [#allocation9], %s62
      %s64 = sshll.u32 [#allocation8], 4
      %s65 = int_to_ptr.vmem [resolvable:$true] %s64
      %70 = dma.hbm_to_vmem [thread:$0]  %s5, 2048, %s65, [#allocation9], 64, 64, 4
    $region25: #{tpu_custom_call.1} parent=1 // pred_fallthru
      _
    // Predicated region
    $region26: #{tpu_custom_call.1} parent=1 // pred_check
      _
    $region27: #{tpu_custom_call.1} parent=1 // pred_check_branch
      %72 = sbr.rel (0) target = $region29
    $region28: #{tpu_custom_call.1} parent=1 // pred_region
      _
    $region29: #{tpu_custom_call.1} parent=1 // pred_fallthru
      _
    // Predicated region
    $region30: #{tpu_custom_call.1} parent=1 // pred_check
      _
    $region31: #{tpu_custom_call.1} parent=1 // pred_check_branch
      %74 = sbr.rel (0) target = $region33
    $region32: #{tpu_custom_call.1} parent=1 // pred_region
      %s76 = ssub.s32 1024, 1024
      %77 = vsyncadd [#allocation9], %s76
      %s78 = sshll.u32 [#allocation10], 4
      %s79 = int_to_ptr.vmem [resolvable:$true] %s78
      %84 = dma.hbm_to_vmem [thread:$0]  %s7, 1024, %s79, [#allocation9], 64, 64, 4
    $region33: #{tpu_custom_call.1} parent=1 // pred_fallthru
      _
    // Predicated region
    $region34: #{tpu_custom_call.1} parent=1 // pred_check
      _
    $region35: #{tpu_custom_call.1} parent=1 // pred_check_branch
      %86 = sbr.rel (0) target = $region37
    $region36: #{tpu_custom_call.1} parent=1 // pred_region
      _
    $region37: #{tpu_custom_call.1} parent=1 // pred_fallthru
      _
    // Predicated region
    $region38: #{tpu_custom_call.1} parent=1 // pred_check
      _
    $region39: #{tpu_custom_call.1} parent=1 // pred_check_branch
      %88 = sbr.rel (0) target = $region41
    $region40: #{tpu_custom_call.1} parent=1 // pred_region
      %89 = dma.done [#allocation3], 64
    $region41: #{tpu_custom_call.1} parent=1 // pred_fallthru
      _
    // Predicated region
    $region42: #{tpu_custom_call.1} parent=1 // pred_check
      _
    $region43: #{tpu_custom_call.1} parent=1 // pred_check_branch
      %91 = sbr.rel (0) target = $region45
    $region44: #{tpu_custom_call.1} parent=1 // pred_region
      %92 = dma.done [#allocation6], 1024
    $region45: #{tpu_custom_call.1} parent=1 // pred_fallthru
      _
    // Predicated region
    $region46: #{tpu_custom_call.1} parent=1 // pred_check
      _
    $region47: #{tpu_custom_call.1} parent=1 // pred_check_branch
      %94 = sbr.rel (0) target = $region49
    $region48: #{tpu_custom_call.1} parent=1 // pred_region
      %95 = dma.done [#allocation6], 8192
    $region49: #{tpu_custom_call.1} parent=1 // pred_fallthru
      _
    // Predicated region
    $region50: #{tpu_custom_call.1} parent=1 // pred_check
      _
    $region51: #{tpu_custom_call.1} parent=1 // pred_check_branch
      %97 = sbr.rel (0) target = $region53
    $region52: #{tpu_custom_call.1} parent=1 // pred_region
      %98 = dma.done [#allocation9], 2048
    $region53: #{tpu_custom_call.1} parent=1 // pred_fallthru
      _
    // Predicated region
    $region54: #{tpu_custom_call.1} parent=1 // pred_check
      _
    $region55: #{tpu_custom_call.1} parent=1 // pred_check_branch
      %100 = sbr.rel (0) target = $region57
    $region56: #{tpu_custom_call.1} parent=1 // pred_region
      %101 = dma.done [#allocation9], 1024
    $region57: #{tpu_custom_call.1} parent=1 // pred_fallthru
      _
    %v103 = vld [vmem:[#allocation2] sm:$0xf]
    %v104 = vld [vmem:[#allocation5] sm:$0xff]
    %v105 = vld [vmem:[#allocation5 + $0x8] sm:$0xff]
    %v106 = vld [vmem:[#allocation5 + $0x10] sm:$0xff]
    %v107 = vld [vmem:[#allocation5 + $0x18] sm:$0xff]
    %v108 = vld [vmem:[#allocation5 + $0x20] sm:$0xff]
    %v109 = vld [vmem:[#allocation5 + $0x28] sm:$0xff]
    %v110 = vld [vmem:[#allocation5 + $0x30] sm:$0xff]
    %v111 = vld [vmem:[#allocation5 + $0x38] sm:$0xff]
    %v112 = vld [vmem:[%s2] sm:$0xf]
    %v114 = vlaneseq
    %v115 = vshrl.u32 %v114, 7
    %v116 = vsub.s32 0, %v115
    %v117 = vrot.slane %v112, %v116
    %v118 = vlaneseq
    %v119 = vshrl.u32 %v118, 7
    %v120 = vsub.s32 1, %v119
    %v121 = vrot.slane %v112, %v120
    %v122 = vlaneseq
    %v123 = vshrl.u32 %v122, 7
    %v124 = vsub.s32 2, %v123
    %v125 = vrot.slane %v112, %v124
    %v126 = vlaneseq
    %v127 = vshrl.u32 %v126, 7
    %v128 = vsub.s32 3, %v127
    %v129 = vrot.slane %v112, %v128
    %v142 = vunpack.c.l.b16 %v104
    %v143 = vunpack.c.h.b16 %v104
    %v144 = vunpack.c.l.b16 %v105
    %v145 = vunpack.c.h.b16 %v105
    %v146 = vunpack.c.l.b16 %v106
    %v147 = vunpack.c.h.b16 %v106
    %v148 = vunpack.c.l.b16 %v107
    %v149 = vunpack.c.h.b16 %v107
    %v150 = vunpack.c.l.b16 %v108
    %v151 = vunpack.c.h.b16 %v108
    %v152 = vunpack.c.l.b16 %v109
    %v153 = vunpack.c.h.b16 %v109
    %v154 = vunpack.c.l.b16 %v110
    %v155 = vunpack.c.h.b16 %v110
    %v156 = vunpack.c.l.b16 %v111
    %v157 = vunpack.c.h.b16 %v111
    %v158 = vpack.c.b16 %v146, %v142
    %v159 = vpack.c.b16 %v147, %v143
    %v160 = vpack.c.b16 %v148, %v144
    %v161 = vpack.c.b16 %v149, %v145
    %v162 = vpack.c.b16 %v154, %v150
    %v163 = vpack.c.b16 %v155, %v151
    %v164 = vpack.c.b16 %v156, %v152
    %v165 = vpack.c.b16 %v157, %v153
    %vm174 = vcmask 261120
    %v176 = vsel %vm174, %v103, 0
    %178 = vmatprep.subr.bf16.mxu0 %v159
    %179 = vmatpush1.bf16.msra.mxu0 %v158
    %180 = vmatprep.subr.bf16.mxu0 %v163
    %181 = vmatpush1.bf16.msra.mxu0 %v162
    %182 = vmatprep.subr.bf16.mxu0 0
    %183 = vmatpush1.bf16.msra.mxu0 0
    %184 = vmatprep.subr.bf16.mxu0 0
    %185 = vmatpush1.bf16.msra.mxu0 0
    %186 = vmatprep.subr.bf16.mxu0 0
    %187 = vmatpush1.bf16.msra.mxu0 0
    %188 = vmatprep.subr.bf16.mxu0 0
    %189 = vmatpush1.bf16.msra.mxu0 0
    %190 = vmatprep.subr.bf16.mxu0 0
    %191 = vmatpush1.bf16.msra.mxu0 0
    %192 = vmatprep.subr.bf16.mxu0 0
    %193 = vmatpush1.bf16.msra.mxu0 0
    %194 = vmatprep.subr.bf16.mxu0 0
    %195 = vmatpush1.bf16.msra.mxu0 0
    %196 = vmatprep.subr.bf16.mxu0 0
    %197 = vmatpush1.bf16.msra.mxu0 0
    %198 = vmatprep.subr.bf16.mxu0 0
    %199 = vmatpush1.bf16.msra.mxu0 0
    %200 = vmatprep.subr.bf16.mxu0 0
    %201 = vmatpush1.bf16.msra.mxu0 0
    %202 = vmatprep.subr.bf16.mxu0 0
    %203 = vmatpush1.bf16.msra.mxu0 0
    %204 = vmatprep.subr.bf16.mxu0 0
    %205 = vmatpush1.bf16.msra.mxu0 0
    %206 = vmatprep.subr.bf16.mxu0 0
    %207 = vmatpush1.bf16.msra.mxu0 0
    %208 = vmatprep.subr.bf16.mxu0 0
    %209 = vmatpush1.bf16.msra.mxu0 0
    %210 = vmatprep.mubr.bf16.mxu0 0
    %211 = vmatmul.mubr.bf16.gmra.mrb[0].mxu0 %v176
    %v212 = vpop.f32.mrb[0].mxu0
    %v213 = vadd.f32 %v117, %v212
    %v214 = vpop.f32.mrb[0].mxu0
    %v215 = vadd.f32 %v121, %v214
    %v216 = vpop.f32.mrb[0].mxu0
    %v217 = vpop.f32.mrb[0].mxu0
    %218 = vdwg.mxu0
    %219 = vmatprep.subr.bf16.mxu0 %v161
    %220 = vmatpush1.bf16.msra.mxu0 %v160
    %221 = vmatprep.subr.bf16.mxu0 %v165
    %222 = vmatpush1.bf16.msra.mxu0 %v164
    %223 = vmatprep.subr.bf16.mxu0 0
    %224 = vmatpush1.bf16.msra.mxu0 0
    %225 = vmatprep.subr.bf16.mxu0 0
    %226 = vmatpush1.bf16.msra.mxu0 0
    %227 = vmatprep.subr.bf16.mxu0 0
    %228 = vmatpush1.bf16.msra.mxu0 0
    %229 = vmatprep.subr.bf16.mxu0 0
    %230 = vmatpush1.bf16.msra.mxu0 0
    %231 = vmatprep.subr.bf16.mxu0 0
    %232 = vmatpush1.bf16.msra.mxu0 0
    %233 = vmatprep.subr.bf16.mxu0 0
    %234 = vmatpush1.bf16.msra.mxu0 0
    %235 = vmatprep.subr.bf16.mxu0 0
    %236 = vmatpush1.bf16.msra.mxu0 0
    %237 = vmatprep.subr.bf16.mxu0 0
    %238 = vmatpush1.bf16.msra.mxu0 0
    %239 = vmatprep.subr.bf16.mxu0 0
    %240 = vmatpush1.bf16.msra.mxu0 0
    %241 = vmatprep.subr.bf16.mxu0 0
    %242 = vmatpush1.bf16.msra.mxu0 0
    %243 = vmatprep.subr.bf16.mxu0 0
    %244 = vmatpush1.bf16.msra.mxu0 0
    %245 = vmatprep.subr.bf16.mxu0 0
    %246 = vmatpush1.bf16.msra.mxu0 0
    %247 = vmatprep.subr.bf16.mxu0 0
    %248 = vmatpush1.bf16.msra.mxu0 0
    %249 = vmatprep.subr.bf16.mxu0 0
    %250 = vmatpush1.bf16.msra.mxu0 0
    %251 = vmatprep.mubr.bf16.mxu0 0
    %252 = vmatmul.mubr.bf16.gmra.mrb[0].mxu0 %v176
    %v253 = vpop.f32.mrb[0].mxu0
    %v254 = vadd.f32 %v125, %v253
    %v255 = vpop.f32.mrb[0].mxu0
    %v256 = vadd.f32 %v129, %v255
    %v257 = vpop.f32.mrb[0].mxu0
    %v258 = vpop.f32.mrb[0].mxu0
    %259 = vdwg.mxu0
    %v260 = vmax.f32 %v213, 0.0
    %v261 = vmax.f32 %v215, 0.0
    %v262 = vmax.f32 %v254, 0.0
    %v263 = vmax.f32 %v256, 0.0
    %v264 = vpack.c.bf16 %v260, %v260
    %v265 = vpack.c.bf16 %v261, %v261
    %v266 = vpack.c.bf16 %v262, %v262
    %v267 = vpack.c.bf16 %v263, %v263
    %v268 = vld [vmem:[#allocation7] sm:$0xff]
    %v269 = vld [vmem:[#allocation7 + $0x8] sm:$0xff]
    %v270 = vld [vmem:[#allocation7 + $0x10] sm:$0xff]
    %v271 = vld [vmem:[#allocation7 + $0x18] sm:$0xff]
    %v272 = vld [vmem:[#allocation7 + $0x20] sm:$0xff]
    %v273 = vld [vmem:[#allocation7 + $0x28] sm:$0xff]
    %v274 = vld [vmem:[#allocation7 + $0x30] sm:$0xff]
    %v275 = vld [vmem:[#allocation7 + $0x38] sm:$0xff]
    %v276 = vld [vmem:[#allocation7 + $0x40] sm:$0xff]
    %v277 = vld [vmem:[#allocation7 + $0x48] sm:$0xff]
    %v278 = vld [vmem:[#allocation7 + $0x50] sm:$0xff]
    %v279 = vld [vmem:[#allocation7 + $0x58] sm:$0xff]
    %v280 = vld [vmem:[#allocation7 + $0x60] sm:$0xff]
    %v281 = vld [vmem:[#allocation7 + $0x68] sm:$0xff]
    %v282 = vld [vmem:[#allocation7 + $0x70] sm:$0xff]
    %v283 = vld [vmem:[#allocation7 + $0x78] sm:$0xff]
    %v284 = vld [vmem:[#allocation7 + $0x80] sm:$0xff]
    %v285 = vld [vmem:[#allocation7 + $0x88] sm:$0xff]
    %v286 = vld [vmem:[#allocation7 + $0x90] sm:$0xff]
    %v287 = vld [vmem:[#allocation7 + $0x98] sm:$0xff]
    %v288 = vld [vmem:[#allocation7 + $0xa0] sm:$0xff]
    %v289 = vld [vmem:[#allocation7 + $0xa8] sm:$0xff]
    %v290 = vld [vmem:[#allocation7 + $0xb0] sm:$0xff]
    %v291 = vld [vmem:[#allocation7 + $0xb8] sm:$0xff]
    %v292 = vld [vmem:[#allocation7 + $0xc0] sm:$0xff]
    %v293 = vld [vmem:[#allocation7 + $0xc8] sm:$0xff]
    %v294 = vld [vmem:[#allocation7 + $0xd0] sm:$0xff]
    %v295 = vld [vmem:[#allocation7 + $0xd8] sm:$0xff]
    %v296 = vld [vmem:[#allocation7 + $0xe0] sm:$0xff]
    %v297 = vld [vmem:[#allocation7 + $0xe8] sm:$0xff]
    %v298 = vld [vmem:[#allocation7 + $0xf0] sm:$0xff]
    %v299 = vld [vmem:[#allocation7 + $0xf8] sm:$0xff]
    %v300 = vld [vmem:[#allocation7 + $0x100] sm:$0xff]
    %v301 = vld [vmem:[#allocation7 + $0x108] sm:$0xff]
    %v302 = vld [vmem:[#allocation7 + $0x110] sm:$0xff]
    %v303 = vld [vmem:[#allocation7 + $0x118] sm:$0xff]
    %v304 = vld [vmem:[#allocation7 + $0x120] sm:$0xff]
    %v305 = vld [vmem:[#allocation7 + $0x128] sm:$0xff]
    %v306 = vld [vmem:[#allocation7 + $0x130] sm:$0xff]
    %v307 = vld [vmem:[#allocation7 + $0x138] sm:$0xff]
    %v308 = vld [vmem:[#allocation7 + $0x140] sm:$0xff]
    %v309 = vld [vmem:[#allocation7 + $0x148] sm:$0xff]
    %v310 = vld [vmem:[#allocation7 + $0x150] sm:$0xff]
    %v311 = vld [vmem:[#allocation7 + $0x158] sm:$0xff]
    %v312 = vld [vmem:[#allocation7 + $0x160] sm:$0xff]
    %v313 = vld [vmem:[#allocation7 + $0x168] sm:$0xff]
    %v314 = vld [vmem:[#allocation7 + $0x170] sm:$0xff]
    %v315 = vld [vmem:[#allocation7 + $0x178] sm:$0xff]
    %v316 = vld [vmem:[#allocation7 + $0x180] sm:$0xff]
    %v317 = vld [vmem:[#allocation7 + $0x188] sm:$0xff]
    %v318 = vld [vmem:[#allocation7 + $0x190] sm:$0xff]
    %v319 = vld [vmem:[#allocation7 + $0x198] sm:$0xff]
    %v320 = vld [vmem:[#allocation7 + $0x1a0] sm:$0xff]
    %v321 = vld [vmem:[#allocation7 + $0x1a8] sm:$0xff]
    %v322 = vld [vmem:[#allocation7 + $0x1b0] sm:$0xff]
    %v323 = vld [vmem:[#allocation7 + $0x1b8] sm:$0xff]
    %v324 = vld [vmem:[#allocation7 + $0x1c0] sm:$0xff]
    %v325 = vld [vmem:[#allocation7 + $0x1c8] sm:$0xff]
    %v326 = vld [vmem:[#allocation7 + $0x1d0] sm:$0xff]
    %v327 = vld [vmem:[#allocation7 + $0x1d8] sm:$0xff]
    %v328 = vld [vmem:[#allocation7 + $0x1e0] sm:$0xff]
    %v329 = vld [vmem:[#allocation7 + $0x1e8] sm:$0xff]
    %v330 = vld [vmem:[#allocation7 + $0x1f0] sm:$0xff]
    %v331 = vld [vmem:[#allocation7 + $0x1f8] sm:$0xff]
    %v332 = vld [vmem:[%s4] sm:$0x3]
    %v334 = vlaneseq
    %v335 = vshrl.u32 %v334, 7
    %v336 = vsub.s32 0, %v335
    %v337 = vrot.slane %v332, %v336
    %v338 = vlaneseq
    %v339 = vshrl.u32 %v338, 7
    %v340 = vsub.s32 1, %v339
    %v341 = vrot.slane %v332, %v340
    %v408 = vunpack.c.l.b16 %v268
    %v409 = vunpack.c.h.b16 %v268
    %v410 = vunpack.c.l.b16 %v269
    %v411 = vunpack.c.h.b16 %v269
    %v412 = vunpack.c.l.b16 %v270
    %v413 = vunpack.c.h.b16 %v270
    %v414 = vunpack.c.l.b16 %v271
    %v415 = vunpack.c.h.b16 %v271
    %v416 = vunpack.c.l.b16 %v272
    %v417 = vunpack.c.h.b16 %v272
    %v418 = vunpack.c.l.b16 %v273
    %v419 = vunpack.c.h.b16 %v273
    %v420 = vunpack.c.l.b16 %v274
    %v421 = vunpack.c.h.b16 %v274
    %v422 = vunpack.c.l.b16 %v275
    %v423 = vunpack.c.h.b16 %v275
    %v424 = vunpack.c.l.b16 %v276
    %v425 = vunpack.c.h.b16 %v276
    %v426 = vunpack.c.l.b16 %v277
    %v427 = vunpack.c.h.b16 %v277
    %v428 = vunpack.c.l.b16 %v278
    %v429 = vunpack.c.h.b16 %v278
    %v430 = vunpack.c.l.b16 %v279
    %v431 = vunpack.c.h.b16 %v279
    %v432 = vunpack.c.l.b16 %v280
    %v433 = vunpack.c.h.b16 %v280
    %v434 = vunpack.c.l.b16 %v281
    %v435 = vunpack.c.h.b16 %v281
    %v436 = vunpack.c.l.b16 %v282
    %v437 = vunpack.c.h.b16 %v282
    %v438 = vunpack.c.l.b16 %v283
    %v439 = vunpack.c.h.b16 %v283
    %v440 = vunpack.c.l.b16 %v284
    %v441 = vunpack.c.h.b16 %v284
    %v442 = vunpack.c.l.b16 %v285
    %v443 = vunpack.c.h.b16 %v285
    %v444 = vunpack.c.l.b16 %v286
    %v445 = vunpack.c.h.b16 %v286
    %v446 = vunpack.c.l.b16 %v287
    %v447 = vunpack.c.h.b16 %v287
    %v448 = vunpack.c.l.b16 %v288
    %v449 = vunpack.c.h.b16 %v288
    %v450 = vunpack.c.l.b16 %v289
    %v451 = vunpack.c.h.b16 %v289
    %v452 = vunpack.c.l.b16 %v290
    %v453 = vunpack.c.h.b16 %v290
    %v454 = vunpack.c.l.b16 %v291
    %v455 = vunpack.c.h.b16 %v291
    %v456 = vunpack.c.l.b16 %v292
    %v457 = vunpack.c.h.b16 %v292
    %v458 = vunpack.c.l.b16 %v293
    %v459 = vunpack.c.h.b16 %v293
    %v460 = vunpack.c.l.b16 %v294
    %v461 = vunpack.c.h.b16 %v294
    %v462 = vunpack.c.l.b16 %v295
    %v463 = vunpack.c.h.b16 %v295
    %v464 = vunpack.c.l.b16 %v296
    %v465 = vunpack.c.h.b16 %v296
    %v466 = vunpack.c.l.b16 %v297
    %v467 = vunpack.c.h.b16 %v297
    %v468 = vunpack.c.l.b16 %v298
    %v469 = vunpack.c.h.b16 %v298
    %v470 = vunpack.c.l.b16 %v299
    %v471 = vunpack.c.h.b16 %v299
    %v472 = vunpack.c.l.b16 %v300
    %v473 = vunpack.c.h.b16 %v300
    %v474 = vunpack.c.l.b16 %v301
    %v475 = vunpack.c.h.b16 %v301
    %v476 = vunpack.c.l.b16 %v302
    %v477 = vunpack.c.h.b16 %v302
    %v478 = vunpack.c.l.b16 %v303
    %v479 = vunpack.c.h.b16 %v303
    %v480 = vunpack.c.l.b16 %v304
    %v481 = vunpack.c.h.b16 %v304
    %v482 = vunpack.c.l.b16 %v305
    %v483 = vunpack.c.h.b16 %v305
    %v484 = vunpack.c.l.b16 %v306
    %v485 = vunpack.c.h.b16 %v306
    %v486 = vunpack.c.l.b16 %v307
    %v487 = vunpack.c.h.b16 %v307
    %v488 = vunpack.c.l.b16 %v308
    %v489 = vunpack.c.h.b16 %v308
    %v490 = vunpack.c.l.b16 %v309
    %v491 = vunpack.c.h.b16 %v309
    %v492 = vunpack.c.l.b16 %v310
    %v493 = vunpack.c.h.b16 %v310
    %v494 = vunpack.c.l.b16 %v311
    %v495 = vunpack.c.h.b16 %v311
    %v496 = vunpack.c.l.b16 %v312
    %v497 = vunpack.c.h.b16 %v312
    %v498 = vunpack.c.l.b16 %v313
    %v499 = vunpack.c.h.b16 %v313
    %v500 = vunpack.c.l.b16 %v314
    %v501 = vunpack.c.h.b16 %v314
    %v502 = vunpack.c.l.b16 %v315
    %v503 = vunpack.c.h.b16 %v315
    %v504 = vunpack.c.l.b16 %v316
    %v505 = vunpack.c.h.b16 %v316
    %v506 = vunpack.c.l.b16 %v317
    %v507 = vunpack.c.h.b16 %v317
    %v508 = vunpack.c.l.b16 %v318
    %v509 = vunpack.c.h.b16 %v318
    %v510 = vunpack.c.l.b16 %v319
    %v511 = vunpack.c.h.b16 %v319
    %v512 = vunpack.c.l.b16 %v320
    %v513 = vunpack.c.h.b16 %v320
    %v514 = vunpack.c.l.b16 %v321
    %v515 = vunpack.c.h.b16 %v321
    %v516 = vunpack.c.l.b16 %v322
    %v517 = vunpack.c.h.b16 %v322
    %v518 = vunpack.c.l.b16 %v323
    %v519 = vunpack.c.h.b16 %v323
    %v520 = vunpack.c.l.b16 %v324
    %v521 = vunpack.c.h.b16 %v324
    %v522 = vunpack.c.l.b16 %v325
    %v523 = vunpack.c.h.b16 %v325
    %v524 = vunpack.c.l.b16 %v326
    %v525 = vunpack.c.h.b16 %v326
    %v526 = vunpack.c.l.b16 %v327
    %v527 = vunpack.c.h.b16 %v327
    %v528 = vunpack.c.l.b16 %v328
    %v529 = vunpack.c.h.b16 %v328
    %v530 = vunpack.c.l.b16 %v329
    %v531 = vunpack.c.h.b16 %v329
    %v532 = vunpack.c.l.b16 %v330
    %v533 = vunpack.c.h.b16 %v330
    %v534 = vunpack.c.l.b16 %v331
    %v535 = vunpack.c.h.b16 %v331
    %v536 = vpack.c.b16 %v410, %v408
    %v537 = vpack.c.b16 %v411, %v409
    %v538 = vpack.c.b16 %v414, %v412
    %v539 = vpack.c.b16 %v415, %v413
    %v540 = vpack.c.b16 %v418, %v416
    %v541 = vpack.c.b16 %v419, %v417
    %v542 = vpack.c.b16 %v422, %v420
    %v543 = vpack.c.b16 %v423, %v421
    %v544 = vpack.c.b16 %v426, %v424
    %v545 = vpack.c.b16 %v427, %v425
    %v546 = vpack.c.b16 %v430, %v428
    %v547 = vpack.c.b16 %v431, %v429
    %v548 = vpack.c.b16 %v434, %v432
    %v549 = vpack.c.b16 %v435, %v433
    %v550 = vpack.c.b16 %v438, %v436
    %v551 = vpack.c.b16 %v439, %v437
    %v552 = vpack.c.b16 %v442, %v440
    %v553 = vpack.c.b16 %v443, %v441
    %v554 = vpack.c.b16 %v446, %v444
    %v555 = vpack.c.b16 %v447, %v445
    %v556 = vpack.c.b16 %v450, %v448
    %v557 = vpack.c.b16 %v451, %v449
    %v558 = vpack.c.b16 %v454, %v452
    %v559 = vpack.c.b16 %v455, %v453
    %v560 = vpack.c.b16 %v458, %v456
    %v561 = vpack.c.b16 %v459, %v457
    %v562 = vpack.c.b16 %v462, %v460
    %v563 = vpack.c.b16 %v463, %v461
    %v564 = vpack.c.b16 %v466, %v464
    %v565 = vpack.c.b16 %v467, %v465
    %v566 = vpack.c.b16 %v470, %v468
    %v567 = vpack.c.b16 %v471, %v469
    %v568 = vpack.c.b16 %v474, %v472
    %v569 = vpack.c.b16 %v475, %v473
    %v570 = vpack.c.b16 %v478, %v476
    %v571 = vpack.c.b16 %v479, %v477
    %v572 = vpack.c.b16 %v482, %v480
    %v573 = vpack.c.b16 %v483, %v481
    %v574 = vpack.c.b16 %v486, %v484
    %v575 = vpack.c.b16 %v487, %v485
    %v576 = vpack.c.b16 %v490, %v488
    %v577 = vpack.c.b16 %v491, %v489
    %v578 = vpack.c.b16 %v494, %v492
    %v579 = vpack.c.b16 %v495, %v493
    %v580 = vpack.c.b16 %v498, %v496
    %v581 = vpack.c.b16 %v499, %v497
    %v582 = vpack.c.b16 %v502, %v500
    %v583 = vpack.c.b16 %v503, %v501
    %v584 = vpack.c.b16 %v506, %v504
    %v585 = vpack.c.b16 %v507, %v505
    %v586 = vpack.c.b16 %v510, %v508
    %v587 = vpack.c.b16 %v511, %v509
    %v588 = vpack.c.b16 %v514, %v512
    %v589 = vpack.c.b16 %v515, %v513
    %v590 = vpack.c.b16 %v518, %v516
    %v591 = vpack.c.b16 %v519, %v517
    %v592 = vpack.c.b16 %v522, %v520
    %v593 = vpack.c.b16 %v523, %v521
    %v594 = vpack.c.b16 %v526, %v524
    %v595 = vpack.c.b16 %v527, %v525
    %v596 = vpack.c.b16 %v530, %v528
    %v597 = vpack.c.b16 %v531, %v529
    %v598 = vpack.c.b16 %v534, %v532
    %v599 = vpack.c.b16 %v535, %v533
    %664 = vmatprep.subr.bf16.mxu0 %v537
    %665 = vmatpush1.bf16.msra.mxu0 %v536
    %666 = vmatprep.subr.bf16.mxu0 %v539
    %667 = vmatpush1.bf16.msra.mxu0 %v538
    %668 = vmatprep.subr.bf16.mxu0 %v541
    %669 = vmatpush1.bf16.msra.mxu0 %v540
    %670 = vmatprep.subr.bf16.mxu0 %v543
    %671 = vmatpush1.bf16.msra.mxu0 %v542
    %672 = vmatprep.subr.bf16.mxu0 %v545
    %673 = vmatpush1.bf16.msra.mxu0 %v544
    %674 = vmatprep.subr.bf16.mxu0 %v547
    %675 = vmatpush1.bf16.msra.mxu0 %v546
    %676 = vmatprep.subr.bf16.mxu0 %v549
    %677 = vmatpush1.bf16.msra.mxu0 %v548
    %678 = vmatprep.subr.bf16.mxu0 %v551
    %679 = vmatpush1.bf16.msra.mxu0 %v550
    %680 = vmatprep.subr.bf16.mxu0 %v553
    %681 = vmatpush1.bf16.msra.mxu0 %v552
    %682 = vmatprep.subr.bf16.mxu0 %v555
    %683 = vmatpush1.bf16.msra.mxu0 %v554
    %684 = vmatprep.subr.bf16.mxu0 %v557
    %685 = vmatpush1.bf16.msra.mxu0 %v556
    %686 = vmatprep.subr.bf16.mxu0 %v559
    %687 = vmatpush1.bf16.msra.mxu0 %v558
    %688 = vmatprep.subr.bf16.mxu0 %v561
    %689 = vmatpush1.bf16.msra.mxu0 %v560
    %690 = vmatprep.subr.bf16.mxu0 %v563
    %691 = vmatpush1.bf16.msra.mxu0 %v562
    %692 = vmatprep.subr.bf16.mxu0 %v565
    %693 = vmatpush1.bf16.msra.mxu0 %v564
    %694 = vmatprep.subr.bf16.mxu0 %v567
    %695 = vmatpush1.bf16.msra.mxu0 %v566
    %696 = vmatprep.mubr.bf16.mxu0 %v265
    %697 = vmatmul.mubr.bf16.gmra.mrb[0].mxu0 %v264
    %v698 = vpop.f32.mrb[0].mxu0
    %v699 = vadd.f32 %v337, %v698
    %v700 = vpop.f32.mrb[0].mxu0
    %v701 = vadd.f32 %v341, %v700
    %v702 = vpop.f32.mrb[0].mxu0
    %v703 = vpop.f32.mrb[0].mxu0
    %704 = vdwg.mxu0
    %705 = vmatprep.subr.bf16.mxu0 %v569
    %706 = vmatpush1.bf16.msra.mxu0 %v568
    %707 = vmatprep.subr.bf16.mxu0 %v571
    %708 = vmatpush1.bf16.msra.mxu0 %v570
    %709 = vmatprep.subr.bf16.mxu0 %v573
    %710 = vmatpush1.bf16.msra.mxu0 %v572
    %711 = vmatprep.subr.bf16.mxu0 %v575
    %712 = vmatpush1.bf16.msra.mxu0 %v574
    %713 = vmatprep.subr.bf16.mxu0 %v577
    %714 = vmatpush1.bf16.msra.mxu0 %v576
    %715 = vmatprep.subr.bf16.mxu0 %v579
    %716 = vmatpush1.bf16.msra.mxu0 %v578
    %717 = vmatprep.subr.bf16.mxu0 %v581
    %718 = vmatpush1.bf16.msra.mxu0 %v580
    %719 = vmatprep.subr.bf16.mxu0 %v583
    %720 = vmatpush1.bf16.msra.mxu0 %v582
    %721 = vmatprep.subr.bf16.mxu0 %v585
    %722 = vmatpush1.bf16.msra.mxu0 %v584
    %723 = vmatprep.subr.bf16.mxu0 %v587
    %724 = vmatpush1.bf16.msra.mxu0 %v586
    %725 = vmatprep.subr.bf16.mxu0 %v589
    %726 = vmatpush1.bf16.msra.mxu0 %v588
    %727 = vmatprep.subr.bf16.mxu0 %v591
    %728 = vmatpush1.bf16.msra.mxu0 %v590
    %729 = vmatprep.subr.bf16.mxu0 %v593
    %730 = vmatpush1.bf16.msra.mxu0 %v592
    %731 = vmatprep.subr.bf16.mxu0 %v595
    %732 = vmatpush1.bf16.msra.mxu0 %v594
    %733 = vmatprep.subr.bf16.mxu0 %v597
    %734 = vmatpush1.bf16.msra.mxu0 %v596
    %735 = vmatprep.subr.bf16.mxu0 %v599
    %736 = vmatpush1.bf16.msra.mxu0 %v598
    %737 = vmatprep.mubr.bf16.mxu0 %v267
    %738 = vmatmul.mubr.bf16.gmra.mrb[0].mxu0 %v266
    %v739 = vpop.f32.mrb[0].mxu0
    %v740 = vadd.f32 %v699, %v739
    %v741 = vpop.f32.mrb[0].mxu0
    %v742 = vadd.f32 %v701, %v741
    %v743 = vpop.f32.mrb[0].mxu0
    %v744 = vpop.f32.mrb[0].mxu0
    %745 = vdwg.mxu0
    %v746 = vmax.f32 %v740, 0.0
    %v747 = vmax.f32 %v742, 0.0
    %v748 = vpack.c.bf16 %v746, %v746
    %v749 = vpack.c.bf16 %v747, %v747
    %v750 = vld [vmem:[#allocation8] sm:$0xf]
    %v751 = vld [vmem:[#allocation8 + $0x4] sm:$0xf]
    %v752 = vld [vmem:[#allocation8 + $0x8] sm:$0xf]
    %v753 = vld [vmem:[#allocation8 + $0xc] sm:$0xf]
    %v754 = vld [vmem:[#allocation8 + $0x10] sm:$0xf]
    %v755 = vld [vmem:[#allocation8 + $0x14] sm:$0xf]
    %v756 = vld [vmem:[#allocation8 + $0x18] sm:$0xf]
    %v757 = vld [vmem:[#allocation8 + $0x1c] sm:$0xf]
    %v758 = vld [vmem:[#allocation8 + $0x20] sm:$0xf]
    %v759 = vld [vmem:[#allocation8 + $0x24] sm:$0xf]
    %v760 = vld [vmem:[#allocation8 + $0x28] sm:$0xf]
    %v761 = vld [vmem:[#allocation8 + $0x2c] sm:$0xf]
    %v762 = vld [vmem:[#allocation8 + $0x30] sm:$0xf]
    %v763 = vld [vmem:[#allocation8 + $0x34] sm:$0xf]
    %v764 = vld [vmem:[#allocation8 + $0x38] sm:$0xf]
    %v765 = vld [vmem:[#allocation8 + $0x3c] sm:$0xf]
    %v766 = vld [vmem:[#allocation8 + $0x40] sm:$0xf]
    %v767 = vld [vmem:[#allocation8 + $0x44] sm:$0xf]
    %v768 = vld [vmem:[#allocation8 + $0x48] sm:$0xf]
    %v769 = vld [vmem:[#allocation8 + $0x4c] sm:$0xf]
    %v770 = vld [vmem:[#allocation8 + $0x50] sm:$0xf]
    %v771 = vld [vmem:[#allocation8 + $0x54] sm:$0xf]
    %v772 = vld [vmem:[#allocation8 + $0x58] sm:$0xf]
    %v773 = vld [vmem:[#allocation8 + $0x5c] sm:$0xf]
    %v774 = vld [vmem:[#allocation8 + $0x60] sm:$0xf]
    %v775 = vld [vmem:[#allocation8 + $0x64] sm:$0xf]
    %v776 = vld [vmem:[#allocation8 + $0x68] sm:$0xf]
    %v777 = vld [vmem:[#allocation8 + $0x6c] sm:$0xf]
    %v778 = vld [vmem:[#allocation8 + $0x70] sm:$0xf]
    %v779 = vld [vmem:[#allocation8 + $0x74] sm:$0xf]
    %v780 = vld [vmem:[#allocation8 + $0x78] sm:$0xf]
    %v781 = vld [vmem:[#allocation8 + $0x7c] sm:$0xf]
    %v782 = vld [vmem:[%s6] sm:$0x1]
    %v784 = vlaneseq
    %v785 = vshrl.u32 %v784, 7
    %v786 = vsub.s32 0, %v785
    %v787 = vrot.slane %v782, %v786
    %v821 = vunpack.c.l.b16 %v750
    %v822 = vunpack.c.l.b16 %v751
    %v823 = vunpack.c.l.b16 %v752
    %v824 = vunpack.c.l.b16 %v753
    %v825 = vunpack.c.l.b16 %v754
    %v826 = vunpack.c.l.b16 %v755
    %v827 = vunpack.c.l.b16 %v756
    %v828 = vunpack.c.l.b16 %v757
    %v829 = vunpack.c.l.b16 %v758
    %v830 = vunpack.c.l.b16 %v759
    %v831 = vunpack.c.l.b16 %v760
    %v832 = vunpack.c.l.b16 %v761
    %v833 = vunpack.c.l.b16 %v762
    %v834 = vunpack.c.l.b16 %v763
    %v835 = vunpack.c.l.b16 %v764
    %v836 = vunpack.c.l.b16 %v765
    %v837 = vunpack.c.l.b16 %v766
    %v838 = vunpack.c.l.b16 %v767
    %v839 = vunpack.c.l.b16 %v768
    %v840 = vunpack.c.l.b16 %v769
    %v841 = vunpack.c.l.b16 %v770
    %v842 = vunpack.c.l.b16 %v771
    %v843 = vunpack.c.l.b16 %v772
    %v844 = vunpack.c.l.b16 %v773
    %v845 = vunpack.c.l.b16 %v774
    %v846 = vunpack.c.l.b16 %v775
    %v847 = vunpack.c.l.b16 %v776
    %v848 = vunpack.c.l.b16 %v777
    %v849 = vunpack.c.l.b16 %v778
    %v850 = vunpack.c.l.b16 %v779
    %v851 = vunpack.c.l.b16 %v780
    %v852 = vunpack.c.l.b16 %v781
    %v853 = vpack.c.b16 %v822, %v821
    %v854 = vpack.c.b16 %v824, %v823
    %v855 = vpack.c.b16 %v826, %v825
    %v856 = vpack.c.b16 %v828, %v827
    %v857 = vpack.c.b16 %v830, %v829
    %v858 = vpack.c.b16 %v832, %v831
    %v859 = vpack.c.b16 %v834, %v833
    %v860 = vpack.c.b16 %v836, %v835
    %v861 = vpack.c.b16 %v838, %v837
    %v862 = vpack.c.b16 %v840, %v839
    %v863 = vpack.c.b16 %v842, %v841
    %v864 = vpack.c.b16 %v844, %v843
    %v865 = vpack.c.b16 %v846, %v845
    %v866 = vpack.c.b16 %v848, %v847
    %v867 = vpack.c.b16 %v850, %v849
    %v868 = vpack.c.b16 %v852, %v851
    %885 = vmatprep.subr.bf16.mxu0 0
    %886 = vmatpush1.bf16.msra.mxu0 %v853
    %887 = vmatprep.subr.bf16.mxu0 0
    %888 = vmatpush1.bf16.msra.mxu0 %v854
    %889 = vmatprep.subr.bf16.mxu0 0
    %890 = vmatpush1.bf16.msra.mxu0 %v855
    %891 = vmatprep.subr.bf16.mxu0 0
    %892 = vmatpush1.bf16.msra.mxu0 %v856
    %893 = vmatprep.subr.bf16.mxu0 0
    %894 = vmatpush1.bf16.msra.mxu0 %v857
    %895 = vmatprep.subr.bf16.mxu0 0
    %896 = vmatpush1.bf16.msra.mxu0 %v858
    %897 = vmatprep.subr.bf16.mxu0 0
    %898 = vmatpush1.bf16.msra.mxu0 %v859
    %899 = vmatprep.subr.bf16.mxu0 0
    %900 = vmatpush1.bf16.msra.mxu0 %v860
    %901 = vmatprep.subr.bf16.mxu0 0
    %902 = vmatpush1.bf16.msra.mxu0 %v861
    %903 = vmatprep.subr.bf16.mxu0 0
    %904 = vmatpush1.bf16.msra.mxu0 %v862
    %905 = vmatprep.subr.bf16.mxu0 0
    %906 = vmatpush1.bf16.msra.mxu0 %v863
    %907 = vmatprep.subr.bf16.mxu0 0
    %908 = vmatpush1.bf16.msra.mxu0 %v864
    %909 = vmatprep.subr.bf16.mxu0 0
    %910 = vmatpush1.bf16.msra.mxu0 %v865
    %911 = vmatprep.subr.bf16.mxu0 0
    %912 = vmatpush1.bf16.msra.mxu0 %v866
    %913 = vmatprep.subr.bf16.mxu0 0
    %914 = vmatpush1.bf16.msra.mxu0 %v867
    %915 = vmatprep.subr.bf16.mxu0 0
    %916 = vmatpush1.bf16.msra.mxu0 %v868
    %917 = vmatprep.mubr.bf16.mxu0 %v749
    %918 = vmatmul.mubr.bf16.gmra.mrb[0].mxu0 %v748
    %v919 = vpop.f32.mrb[0].mxu0
    %v920 = vadd.f32 %v787, %v919
    %v921 = vpop.f32.mrb[0].mxu0
    %v922 = vpop.f32.mrb[0].mxu0
    %v923 = vpop.f32.mrb[0].mxu0
    %924 = vdwg.mxu0
    %v925 = vmax.f32 %v920, 0.0
    %v926 = vpack.c.bf16 %v925, %v925
    %927 = vst [vmem:[#allocation12] sm:$0xf] %v926
    %v928 = vld [vmem:[#allocation10] sm:$0xf]
    %v929 = vld [vmem:[#allocation10 + $0x4] sm:$0xf]
    %v930 = vld [vmem:[#allocation10 + $0x8] sm:$0xf]
    %v931 = vld [vmem:[#allocation10 + $0xc] sm:$0xf]
    %v932 = vld [vmem:[#allocation10 + $0x10] sm:$0xf]
    %v933 = vld [vmem:[#allocation10 + $0x14] sm:$0xf]
    %v934 = vld [vmem:[#allocation10 + $0x18] sm:$0xf]
    %v935 = vld [vmem:[#allocation10 + $0x1c] sm:$0xf]
    %v936 = vld [vmem:[#allocation10 + $0x20] sm:$0xf]
    %v937 = vld [vmem:[#allocation10 + $0x24] sm:$0xf]
    %v938 = vld [vmem:[#allocation10 + $0x28] sm:$0xf]
    %v939 = vld [vmem:[#allocation10 + $0x2c] sm:$0xf]
    %v940 = vld [vmem:[#allocation10 + $0x30] sm:$0xf]
    %v941 = vld [vmem:[#allocation10 + $0x34] sm:$0xf]
    %v942 = vld [vmem:[#allocation10 + $0x38] sm:$0xf]
    %v943 = vld [vmem:[#allocation10 + $0x3c] sm:$0xf]
    %v944 = vld [vmem:[%s8] sm:$0x1]
    %v946 = vlaneseq
    %v947 = vshrl.u32 %v946, 7
    %v948 = vsub.s32 0, %v947
    %v949 = vrot.slane %v944, %v948
    %v967 = vunpack.c.l.b16 %v928
    %v968 = vunpack.c.l.b16 %v929
    %v969 = vunpack.c.l.b16 %v930
    %v970 = vunpack.c.l.b16 %v931
    %v971 = vunpack.c.l.b16 %v932
    %v972 = vunpack.c.l.b16 %v933
    %v973 = vunpack.c.l.b16 %v934
    %v974 = vunpack.c.l.b16 %v935
    %v975 = vunpack.c.l.b16 %v936
    %v976 = vunpack.c.l.b16 %v937
    %v977 = vunpack.c.l.b16 %v938
    %v978 = vunpack.c.l.b16 %v939
    %v979 = vunpack.c.l.b16 %v940
    %v980 = vunpack.c.l.b16 %v941
    %v981 = vunpack.c.l.b16 %v942
    %v982 = vunpack.c.l.b16 %v943
    %v983 = vpack.c.b16 %v968, %v967
    %v984 = vpack.c.b16 %v970, %v969
    %v985 = vpack.c.b16 %v972, %v971
    %v986 = vpack.c.b16 %v974, %v973
    %v987 = vpack.c.b16 %v976, %v975
    %v988 = vpack.c.b16 %v978, %v977
    %v989 = vpack.c.b16 %v980, %v979
    %v990 = vpack.c.b16 %v982, %v981
    %999 = vmatprep.subr.bf16.mxu0 0
    %1000 = vmatpush1.bf16.msra.mxu0 %v983
    %1001 = vmatprep.subr.bf16.mxu0 0
    %1002 = vmatpush1.bf16.msra.mxu0 %v984
    %1003 = vmatprep.subr.bf16.mxu0 0
    %1004 = vmatpush1.bf16.msra.mxu0 %v985
    %1005 = vmatprep.subr.bf16.mxu0 0
    %1006 = vmatpush1.bf16.msra.mxu0 %v986
    %1007 = vmatprep.subr.bf16.mxu0 0
    %1008 = vmatpush1.bf16.msra.mxu0 %v987
    %1009 = vmatprep.subr.bf16.mxu0 0
    %1010 = vmatpush1.bf16.msra.mxu0 %v988
    %1011 = vmatprep.subr.bf16.mxu0 0
    %1012 = vmatpush1.bf16.msra.mxu0 %v989
    %1013 = vmatprep.subr.bf16.mxu0 0
    %1014 = vmatpush1.bf16.msra.mxu0 %v990
    %1015 = vmatprep.subr.bf16.mxu0 0
    %1016 = vmatpush1.bf16.msra.mxu0 0
    %1017 = vmatprep.subr.bf16.mxu0 0
    %1018 = vmatpush1.bf16.msra.mxu0 0
    %1019 = vmatprep.subr.bf16.mxu0 0
    %1020 = vmatpush1.bf16.msra.mxu0 0
    %1021 = vmatprep.subr.bf16.mxu0 0
    %1022 = vmatpush1.bf16.msra.mxu0 0
    %1023 = vmatprep.subr.bf16.mxu0 0
    %1024 = vmatpush1.bf16.msra.mxu0 0
    %1025 = vmatprep.subr.bf16.mxu0 0
    %1026 = vmatpush1.bf16.msra.mxu0 0
    %1027 = vmatprep.subr.bf16.mxu0 0
    %1028 = vmatpush1.bf16.msra.mxu0 0
    %1029 = vmatprep.subr.bf16.mxu0 0
    %1030 = vmatpush1.bf16.msra.mxu0 0
    %1031 = vmatprep.mubr.bf16.mxu0 0
    %1032 = vmatmul.mubr.bf16.gmra.mrb[0].mxu0 %v926
    %v1033 = vpop.f32.mrb[0].mxu0
    %v1034 = vadd.f32 %v949, %v1033
    %v1035 = vpop.f32.mrb[0].mxu0
    %v1036 = vpop.f32.mrb[0].mxu0
    %v1037 = vpop.f32.mrb[0].mxu0
    %1038 = vdwg.mxu0
    %1039 = vmax.xlane.f32.xlu0 %v1034
    %v1040 = vpop.xlane.xlu0 %1039
    %v1041 = vsub.f32 %v1034, %v1040
    %v1042 = vmul.f32 %v1041, 1.442695
    %v1043 = vpow.pop %v1042
    %1044 = vadd.xlane.f32.xlu0 %v1043
    %v1045 = vpop.xlane.xlu0 %1044
    %v1046 = vrcp.pop %v1045
    %v1047 = vmul.f32 %v1043, %v1046
    %v1048 = vpack.c.bf16 %v1047, %v1047
    %1049 = vst [vmem:[#allocation11] sm:$0xf] %v1048
    // Predicated region
    $region58: #{tpu_custom_call.1} parent=1 // pred_check
      _
    $region59: #{tpu_custom_call.1} parent=1 // pred_check_branch
      %1051 = sbr.rel (0) target = $region61
    $region60: #{tpu_custom_call.1} parent=1 // pred_region
      %s1053 = ssub.s32 64, 64
      %1054 = vsyncadd [#allocation4], %s1053
      %s1056 = sshll.u32 [#allocation11], 4
      %s1057 = int_to_ptr.vmem [resolvable:$true] %s1056
      %1059 = dma.vmem_to_hbm [thread:$0]  %s1057, 64, %s9, [#allocation4]
    $region61: #{tpu_custom_call.1} parent=1 // pred_fallthru
      _
    // Predicated region
    $region62: #{tpu_custom_call.1} parent=1 // pred_check
      _
    $region63: #{tpu_custom_call.1} parent=1 // pred_check_branch
      %1061 = sbr.rel (0) target = $region65
    $region64: #{tpu_custom_call.1} parent=1 // pred_region
      %s1063 = ssub.s32 64, 64
      %1064 = vsyncadd [#allocation13], %s1063
      %s1066 = sshll.u32 [#allocation12], 4
      %s1067 = int_to_ptr.vmem [resolvable:$true] %s1066
      %1069 = dma.vmem_to_hbm [thread:$0]  %s1067, 64, %s10, [#allocation13]
    $region65: #{tpu_custom_call.1} parent=1 // pred_fallthru
      _
    // Predicated region
    $region66: #{tpu_custom_call.1} parent=1 // pred_check
      _
    $region67: #{tpu_custom_call.1} parent=1 // pred_check_branch
      %1071 = sbr.rel (0) target = $region69
    $region68: #{tpu_custom_call.1} parent=1 // pred_region
      %1072 = dma.done [#allocation4], 64
    $region69: #{tpu_custom_call.1} parent=1 // pred_fallthru
      _
    // Predicated region
    $region70: #{tpu_custom_call.1} parent=1 // pred_check
      _
    $region71: #{tpu_custom_call.1} parent=1 // pred_check_branch
      %1074 = sbr.rel (0) target = $region73
    $region72: #{tpu_custom_call.1} parent=1 // pred_region
      %1075 = dma.done [#allocation13], 64
    $region73: #{tpu_custom_call.1} parent=1 // pred_fallthru
      _
    %1076 = vsyncpa [#allocation3], 1
    %1077 = vsyncpa [#allocation6], 1
    %1078 = vsyncpa [#allocation9], 1
    %1079 = vsyncpa [#allocation4], 1
    %1080 = vsyncpa [#allocation13], 1

</llo_original>
